<compile_context>
chip_gen: v7x
topology: tpu7x:2x2x1
jax: 0.10.0
libtpu: 0.0.40
codegen_flags: <defaults>
</compile_context>

<pallas_src>
import functools

import jax
import jax.numpy as jnp
from jax.experimental import pallas as pl
from jax.experimental.pallas import tpu as pltpu

LANE = 128
SUBLANE = 8
ALIGN = SUBLANE * LANE          # 1024-element alignment for the kernel prefix
MAX_BLOCK_ROWS = 2048           # (2048,128) f32 = 1 MiB per input block


def _round_up(x, m):
    return ((x + m - 1) // m) * m


def _mse_partial_kernel(p_ref, t_ref, partial_ref, *, block_rows, rows_total,
                        mask_rows):
    # Per-block partial sum of squared error, kept vreg-shaped (8, 128).
    d = p_ref[...].astype(jnp.float32) - t_ref[...].astype(jnp.float32)
    if mask_rows:
        # Last block is partial: zero out rows past the true extent.
        row0 = pl.program_id(0) * block_rows
        row_ids = jax.lax.broadcasted_iota(jnp.int32, d.shape, 0) + row0
        d = jnp.where(row_ids < rows_total, d, 0.0)
    sq = d * d
    # (block_rows, 128) -> (8, 128): pure VPU adds over sublane groups; the
    # single cross-lane/sublane reduction happens once, outside the kernel.
    partial_ref[...] = jnp.sum(
        sq.reshape(block_rows // SUBLANE, SUBLANE, LANE), axis=0)


def _mse_elementwise_kernel(p_ref, t_ref, o_ref):
    # reduction='none': per-element squared error.
    d = p_ref[...].astype(jnp.float32) - t_ref[...].astype(jnp.float32)
    o_ref[...] = (d * d).astype(o_ref.dtype)


def mse_loss(prediction, targets, reduction="mean"):
    assert prediction.shape == targets.shape, "MSELoss expects matching shapes"
    if reduction not in ("mean", "sum", "none"):
        raise ValueError(f"unknown reduction: {reduction}")

    orig_shape = prediction.shape
    orig_dtype = prediction.dtype
    p_flat = prediction.reshape(-1)
    t_flat = targets.reshape(-1)
    n = int(p_flat.shape[0])

    # Kernel handles the 1024-aligned prefix; tiny tail handled in JAX.
    n_main = (n // ALIGN) * ALIGN
    n_tail = n - n_main
    rows = n_main // LANE                       # multiple of 8

    if rows > 0:
        block_rows = min(MAX_BLOCK_ROWS, rows)  # multiple of 8, <= rows
        grid = (pl.cdiv(rows, block_rows),)
        p_main = (p_flat if n_tail == 0 else p_flat[:n_main]).reshape(rows, LANE)
        t_main = (t_flat if n_tail == 0 else t_flat[:n_main]).reshape(rows, LANE)
        in_specs = [
            pl.BlockSpec((block_rows, LANE), lambda i: (i, 0)),
            pl.BlockSpec((block_rows, LANE), lambda i: (i, 0)),
        ]

    if reduction == "none":
        if rows > 0:
            out_main = pl.pallas_call(
                _mse_elementwise_kernel,
                out_shape=jax.ShapeDtypeStruct((rows, LANE), orig_dtype),
                grid=grid,
                in_specs=in_specs,
                out_specs=pl.BlockSpec((block_rows, LANE), lambda i: (i, 0)),
                compiler_params=pltpu.CompilerParams(
                    dimension_semantics=("parallel",)),
            )(p_main, t_main).reshape(-1)
        else:
            out_main = jnp.zeros((0,), orig_dtype)
        if n_tail:
            d_t = (p_flat[n_main:].astype(jnp.float32)
                   - t_flat[n_main:].astype(jnp.float32))
            out_main = jnp.concatenate([out_main, (d_t * d_t).astype(orig_dtype)])
        return out_main.reshape(orig_shape)

    # reduction == 'mean' or 'sum'
    if rows > 0:
        block_rows_ = block_rows
        mask_rows = (rows % block_rows_) != 0
        kernel = functools.partial(_mse_partial_kernel, block_rows=block_rows_,
                                   rows_total=rows, mask_rows=mask_rows)
        partials = pl.pallas_call(
            kernel,
            out_shape=jax.ShapeDtypeStruct((grid[0] * SUBLANE, LANE),
                                           jnp.float32),
            grid=grid,
            in_specs=in_specs,
            out_specs=pl.BlockSpec((SUBLANE, LANE), lambda i: (i, 0)),
            compiler_params=pltpu.CompilerParams(
                dimension_semantics=("parallel",)),
        )(p_main, t_main)
        total = jnp.sum(partials)               # tiny final reduce
    else:
        total = jnp.float32(0.0)

    if n_tail:
        d_t = (p_flat[n_main:].astype(jnp.float32)
               - t_flat[n_main:].astype(jnp.float32))
        total = total + jnp.sum(d_t * d_t)

    if reduction == "mean":
        total = total / n
    return total.astype(orig_dtype)


if __name__ == "__main__":
    key = jax.random.PRNGKey(0)
    k1, k2 = jax.random.split(key)

    # Small NCHW-like shapes, consistent with a typical prediction/target pair.
    x_shape = (2, 4, 16, 16)
    prediction = jax.random.normal(k1, x_shape, dtype=jnp.float32)
    targets = jax.random.normal(k2, x_shape, dtype=jnp.float32)

    loss = jax.block_until_ready(mse_loss(prediction, targets, "mean"))
    ref = jnp.mean((prediction - targets) ** 2)
    assert jnp.allclose(loss, ref, rtol=1e-6, atol=1e-6), (loss, ref)

    loss_sum = jax.block_until_ready(mse_loss(prediction, targets, "sum"))
    assert jnp.allclose(loss_sum, jnp.sum((prediction - targets) ** 2),
                        rtol=1e-5, atol=1e-5)

    loss_none = jax.block_until_ready(mse_loss(prediction, targets, "none"))
    assert loss_none.shape == x_shape
    assert jnp.allclose(loss_none, (prediction - targets) ** 2,
                        rtol=1e-6, atol=1e-6)

    # Unaligned size: exercises the partial-last-block mask and the JAX tail.
    k3, k4 = jax.random.split(k2)
    u_shape = (260, 1031)   # 268060 elems -> 2 grid steps, masked last block, tail
    a = jax.random.normal(k3, u_shape, dtype=jnp.float32)
    b = jax.random.normal(k4, u_shape, dtype=jnp.float32)
    lu = jax.block_until_ready(mse_loss(a, b, "mean"))
    ru = jnp.mean((a - b) ** 2)
    assert jnp.allclose(lu, ru, rtol=1e-5, atol=1e-6), (lu, ru)
    lu_sum = jax.block_until_ready(mse_loss(a, b, "sum"))
    assert jnp.allclose(lu_sum, jnp.sum((a - b) ** 2), rtol=1e-5, atol=1e-3)

    print("KERNEL_OK")
</pallas_src>

<mosaic_0001>
module attributes {stable_mosaic.version = 11 : i64} {
  func.func @_mse_partial_kernel(%arg0: i32, %arg1: memref<16x128xf32, #tpu.memory_space<vmem>>, %arg2: memref<16x128xf32, #tpu.memory_space<vmem>>, %arg3: memref<8x128xf32, #tpu.memory_space<vmem>>) attributes {dimension_semantics = [#tpu.dimension_semantics<parallel>], iteration_bounds = array<i64: 1>, scalar_prefetch = 0 : i64, scratch_operands = 0 : i64, tpu.core_type = #tpu.core_type<tc>, window_params = [{transform_indices = @transform_0, window_bounds = array<i64: 16, 128>}, {transform_indices = @transform_1, window_bounds = array<i64: 16, 128>}, {transform_indices = @transform_2, window_bounds = array<i64: 8, 128>}]} {
    %c0 = arith.constant 0 : index
    %c0_0 = arith.constant 0 : index
    %0 = vector.load %arg1[%c0, %c0_0] : memref<16x128xf32, #tpu.memory_space<vmem>>, vector<16x128xf32>
    %c0_1 = arith.constant 0 : index
    %c0_2 = arith.constant 0 : index
    %1 = vector.load %arg2[%c0_1, %c0_2] : memref<16x128xf32, #tpu.memory_space<vmem>>, vector<16x128xf32>
    %2 = arith.subf %0, %1 : vector<16x128xf32>
    %3 = arith.mulf %2, %2 : vector<16x128xf32>
    %4 = vector.shape_cast %3 : vector<16x128xf32> to vector<2x8x128xf32>
    %cst = arith.constant dense<0.000000e+00> : vector<8x128xf32>
    %5 = vector.multi_reduction <add>, %4, %cst [0] : vector<2x8x128xf32> to vector<8x128xf32>
    %c0_3 = arith.constant 0 : index
    %c0_4 = arith.constant 0 : index
    %6 = vector.load %arg3[%c0_3, %c0_4] : memref<8x128xf32, #tpu.memory_space<vmem>>, vector<8x128xf32>
    tpu.vector_store %arg3[%c0_3, %c0_4], %5 {strides = array<i32>} : memref<8x128xf32, #tpu.memory_space<vmem>>, vector<8x128xf32>,
    return
  }
  func.func @transform_0(%arg0: i32) -> (i32, i32) {
    %c0_i32 = arith.constant 0 : i32
    %c0_i32_0 = arith.constant 0 : i32
    return %arg0, %c0_i32 : i32, i32
  }
  func.func @transform_1(%arg0: i32) -> (i32, i32) {
    %c0_i32 = arith.constant 0 : i32
    %c0_i32_0 = arith.constant 0 : i32
    return %arg0, %c0_i32 : i32, i32
  }
  func.func @transform_2(%arg0: i32) -> (i32, i32) {
    %c0_i32 = arith.constant 0 : i32
    %c0_i32_0 = arith.constant 0 : i32
    return %arg0, %c0_i32 : i32, i32
  }
}

</mosaic_0001>

<llo_original>
// kernel: tpu_custom_call.1
$region0: #{tpu_custom_call.1}
  #allocation0 [shape = 'u32[]', space=smem, size = 0x4, offset = 0x4, fixed_abs, tag = 'smem constant byte address 0x4 - core index']
  #allocation1 [shape = 'u32[144,128]{1,0:T(1,128)}', space=vmem, size = 0x12000, scoped, tag = 'internal scratch']
  %s0 = inlined_call_operand.hbm [shape: f32[16,128], index: 0, kind: input, shape index: {}]
  %s1 = inlined_call_operand.hbm [shape: f32[16,128], index: 1, kind: input, shape index: {}]
  %s2 = inlined_call_operand.hbm [shape: f32[8,128], index: 2, kind: output, shape index: {}]
  %s3 = sld [smem:[#allocation0]]
  $region26: #{tpu_custom_call.1} parent=0
    _
  %s5 = ssub.s32 1, %s3
  %s6 = scalar_select 0, %s5, %s3
  $region1: #{tpu_custom_call.1} parent=0
    #allocation2 [shape = 'u8[8192]{0}', space=vmem, size = 0x2000, scoped, tag = 'input window, operand 0, single buffered']
    #allocation3 [shape = 's32[1]{0}', space=sflag, size = 0x4, scoped, tag = 'scoped memory for tpu_custom_call.1']
    #allocation4 [shape = 's32[1]{0}', space=sflag, size = 0x4, scoped, tag = 'scoped memory for tpu_custom_call.1']
    #allocation5 [shape = 'u8[8192]{0}', space=vmem, size = 0x2000, scoped, tag = 'input window, operand 1, single buffered']
    #allocation6 [shape = 's32[1]{0}', space=sflag, size = 0x4, scoped, tag = 'scoped memory for tpu_custom_call.1']
    #allocation7 [shape = 'u8[4096]{0}', space=vmem, size = 0x1000, scoped, tag = 'output window, operand 0, single buffered']
    %7 = vsyncpa [#allocation3], 0
    %8 = vsyncpa [#allocation6], 0
    %9 = vsyncpa [#allocation4], 0
    // Predicated region
    $region2: #{tpu_custom_call.1} parent=1 // pred_check
      _
    $region3: #{tpu_custom_call.1} parent=1 // pred_check_branch
      %11 = sbr.rel (0) target = $region5
    $region4: #{tpu_custom_call.1} parent=1 // pred_region
      %s13 = ssub.s32 256, 256
      %14 = vsyncadd [#allocation3], %s13
      %s15 = sshll.u32 [#allocation2], 4
      %s16 = int_to_ptr.vmem [resolvable:$true] %s15
      %21 = dma.hbm_to_vmem [thread:$0]  %s0, 256, %s16, [#allocation3], 128, 128, 8
    $region5: #{tpu_custom_call.1} parent=1 // pred_fallthru
      _
    // Predicated region
    $region6: #{tpu_custom_call.1} parent=1 // pred_check
      _
    $region7: #{tpu_custom_call.1} parent=1 // pred_check_branch
      %23 = sbr.rel (0) target = $region9
    $region8: #{tpu_custom_call.1} parent=1 // pred_region
      %s25 = ssub.s32 256, 256
      %26 = vsyncadd [#allocation6], %s25
      %s27 = sshll.u32 [#allocation5], 4
      %s28 = int_to_ptr.vmem [resolvable:$true] %s27
      %33 = dma.hbm_to_vmem [thread:$0]  %s1, 256, %s28, [#allocation6], 128, 128, 8
    $region9: #{tpu_custom_call.1} parent=1 // pred_fallthru
      _
    // Predicated region
    $region10: #{tpu_custom_call.1} parent=1 // pred_check
      _
    $region11: #{tpu_custom_call.1} parent=1 // pred_check_branch
      %35 = sbr.rel (0) target = $region13
    $region12: #{tpu_custom_call.1} parent=1 // pred_region
      %36 = dma.done [#allocation3], 256
    $region13: #{tpu_custom_call.1} parent=1 // pred_fallthru
      _
    // Predicated region
    $region14: #{tpu_custom_call.1} parent=1 // pred_check
      _
    $region15: #{tpu_custom_call.1} parent=1 // pred_check_branch
      %38 = sbr.rel (0) target = $region17
    $region16: #{tpu_custom_call.1} parent=1 // pred_region
      %39 = dma.done [#allocation6], 256
    $region17: #{tpu_custom_call.1} parent=1 // pred_fallthru
      _
    %v40 = vld [vmem:[#allocation2] sm:$0xff]
    %v41 = vld [vmem:[#allocation2 + $0x8] sm:$0xff]
    %v42 = vld [vmem:[#allocation5] sm:$0xff]
    %v43 = vld [vmem:[#allocation5 + $0x8] sm:$0xff]
    %v44 = vsub.f32 %v40, %v42
    %v45 = vsub.f32 %v41, %v43
    %v46 = vmul.f32 %v44, %v44
    %v47 = vmul.f32 %v45, %v45
    %v48 = vadd.f32 %v46, %v47
    %49 = vst [vmem:[#allocation7] sm:$0xff] %v48
    // Predicated region
    $region18: #{tpu_custom_call.1} parent=1 // pred_check
      _
    $region19: #{tpu_custom_call.1} parent=1 // pred_check_branch
      %51 = sbr.rel (0) target = $region21
    $region20: #{tpu_custom_call.1} parent=1 // pred_region
      %s53 = ssub.s32 128, 128
      %54 = vsyncadd [#allocation4], %s53
      %s56 = sshll.u32 [#allocation7], 4
      %s57 = int_to_ptr.vmem [resolvable:$true] %s56
      %59 = dma.vmem_to_hbm [thread:$0]  %s57, 128, %s2, [#allocation4]
    $region21: #{tpu_custom_call.1} parent=1 // pred_fallthru
      _
    // Predicated region
    $region22: #{tpu_custom_call.1} parent=1 // pred_check
      _
    $region23: #{tpu_custom_call.1} parent=1 // pred_check_branch
      %61 = sbr.rel (0) target = $region25
    $region24: #{tpu_custom_call.1} parent=1 // pred_region
      %62 = dma.done [#allocation4], 128
    $region25: #{tpu_custom_call.1} parent=1 // pred_fallthru
      _
    %63 = vsyncpa [#allocation3], 1
    %64 = vsyncpa [#allocation6], 1
    %65 = vsyncpa [#allocation4], 1

</llo_original>
